<compile_context>
chip_gen: v5e
topology: v5e:2x2
jax: 0.10.0
libtpu: 0.0.40
codegen_flags: <defaults>
</compile_context>

<pallas_src>
import functools
from typing import NamedTuple

import jax
import jax.numpy as jnp
from jax import lax
from jax.experimental import pallas as pl
from jax.experimental.pallas import tpu as pltpu

# Deterministic "params" for CombinedLoss: weights and output-key mapping.
LOSS_WEIGHTS = {"cls": 0.7, "reg": 0.3}


class _HeadPlan(NamedTuple):
    rows: int             # total rows of the 2-D view
    cols: int             # last dim of the 2-D view (kept whole per block)
    row_tile: int         # rows per block
    tiles: int            # number of row tiles
    tiles_per_chunk: int  # row tiles assigned to each parallel chunk
    needs_row_mask: bool  # static: last tile has padded rows


def _ceil_div(a, b):
    return -(-a // b)


def _round_up(a, b):
    return _ceil_div(a, b) * b


def _as_2d(a):
    """Free (contiguous, no-copy) reshape of a head to 2-D (rows, last_dim)."""
    if a.ndim >= 2:
        return a.reshape(-1, a.shape[-1])
    return a.reshape(1, -1)


def _plan_head(rows, cols, itemsize, block_budget_bytes, num_chunks):
    bytes_per_row = max(cols * itemsize, 1)
    rows_per_block = max(block_budget_bytes // bytes_per_row, 1)
    if rows_per_block >= rows or rows <= 8:
        # Single block covering the whole head (full-dim block dims need no
        # 8/128 alignment).
        row_tile = rows
    else:
        # Row-tiled: second-to-last block dim must be a multiple of 8.
        row_tile = max((rows_per_block // 8) * 8, 8)
    tiles = max(_ceil_div(rows, row_tile), 1)
    tiles_per_chunk = _ceil_div(tiles, num_chunks)
    needs_row_mask = (rows % row_tile) != 0
    return _HeadPlan(rows, cols, row_tile, tiles, tiles_per_chunk, needs_row_mask)


def _combined_loss_kernel(cls_p_ref, cls_t_ref, reg_p_ref, reg_t_ref,
                          out_cls_ref, out_reg_ref, acc_cls_ref, acc_reg_ref,
                          *, cls_plan: _HeadPlan, reg_plan: _HeadPlan, inner: int):
    c = pl.program_id(0)   # parallel chunk (per-TensorCore on v7x)
    i = pl.program_id(1)   # row-tile step within the chunk (reduction axis)

    # ---- init per-chunk accumulators ----
    @pl.when(i == 0)
    def _init():
        acc_cls_ref[...] = jnp.zeros_like(acc_cls_ref)
        acc_reg_ref[...] = jnp.zeros_like(acc_reg_ref)

    # ---- "cls" head: numerically-stable BCE-with-logits ----
    g_cls = c * cls_plan.tiles_per_chunk + i
    @pl.when(jnp.logical_and(i < cls_plan.tiles_per_chunk, g_cls < cls_plan.tiles))
    def _cls():
        x = cls_p_ref[...].astype(jnp.float32)   # f32 compute (v5e has no bf16 VPU/EUP)
        y = cls_t_ref[...].astype(jnp.float32)
        v = jnp.maximum(x, 0.0) - x * y + jnp.log1p(jnp.exp(-jnp.abs(x)))
        if cls_plan.needs_row_mask:              # statically compiled out when aligned
            nvalid = cls_plan.rows - g_cls * cls_plan.row_tile   # scalar
            row = lax.broadcasted_iota(jnp.int32, v.shape, 0)
            v = jnp.where(row < nvalid, v, 0.0)
        acc_cls_ref[...] += v

    # ---- "reg" head: squared error ----
    g_reg = c * reg_plan.tiles_per_chunk + i
    @pl.when(jnp.logical_and(i < reg_plan.tiles_per_chunk, g_reg < reg_plan.tiles))
    def _reg():
        d = reg_p_ref[...].astype(jnp.float32) - reg_t_ref[...].astype(jnp.float32)
        v = d * d
        if reg_plan.needs_row_mask:
            nvalid = reg_plan.rows - g_reg * reg_plan.row_tile
            row = lax.broadcasted_iota(jnp.int32, v.shape, 0)
            v = jnp.where(row < nvalid, v, 0.0)
        acc_reg_ref[...] += v

    # ---- finalize: one XLU reduce per head, broadcast into this chunk's slot ----
    @pl.when(i == inner - 1)
    def _finalize():
        out_cls_ref[...] = jnp.full(out_cls_ref.shape, jnp.sum(acc_cls_ref[...]),
                                    jnp.float32)
        out_reg_ref[...] = jnp.full(out_reg_ref.shape, jnp.sum(acc_reg_ref[...]),
                                    jnp.float32)


def _bce_mean(x, y):
    x = x.astype(jnp.float32)
    y = y.astype(jnp.float32)
    return jnp.mean(jnp.maximum(x, 0.0) - x * y + jnp.log1p(jnp.exp(-jnp.abs(x))))


def _mse_mean(p, t):
    d = p.astype(jnp.float32) - t.astype(jnp.float32)
    return jnp.mean(d * d)


def combined_loss(out: dict, batch: dict, *, block_budget_bytes=2 << 20,
                  num_chunks=2, min_pallas_elements=4096) -> dict:
    """Mirrors CombinedLoss.forward(out, batch) -> dict of scalar losses."""
    cls_logits, cls_targets = out["cls"], batch["cls"]
    reg_pred, reg_target = out["reg"], batch["reg"]

    n_cls = int(cls_logits.size)
    n_reg = int(reg_pred.size)
    w_cls = float(LOSS_WEIGHTS["cls"])
    w_reg = float(LOSS_WEIGHTS["reg"])

    # ---- small-size bypass: launch/DMA overhead dominates; plain XLA wins ----
    if max(n_cls, n_reg) < min_pallas_elements:
        cls_loss = _bce_mean(cls_logits, cls_targets)
        reg_loss = _mse_mean(reg_pred, reg_target)
        return {"cls_loss": cls_loss, "reg_loss": reg_loss,
                "loss": w_cls * cls_loss + w_reg * reg_loss}

    # Free 2-D views; no padding / concatenation / dtype promotion in HBM.
    cls_p2, cls_t2 = _as_2d(cls_logits), _as_2d(cls_targets)
    reg_p2, reg_t2 = _as_2d(reg_pred), _as_2d(reg_target)
    assert cls_p2.shape == cls_t2.shape and reg_p2.shape == reg_t2.shape

    cls_item = max(cls_p2.dtype.itemsize, cls_t2.dtype.itemsize)
    reg_item = max(reg_p2.dtype.itemsize, reg_t2.dtype.itemsize)
    cls_plan = _plan_head(cls_p2.shape[0], cls_p2.shape[1], cls_item,
                          block_budget_bytes, num_chunks)
    reg_plan = _plan_head(reg_p2.shape[0], reg_p2.shape[1], reg_item,
                          block_budget_bytes, num_chunks)
    inner = max(cls_plan.tiles_per_chunk, reg_plan.tiles_per_chunk)

    kernel = functools.partial(_combined_loss_kernel, cls_plan=cls_plan,
                               reg_plan=reg_plan, inner=inner)

    def _clamped_map(plan):
        # Clamp to the last tile once a head is exhausted: same block index =>
        # the pipeline skips the re-fetch; accumulation is gated in-kernel.
        return lambda c, i: (jnp.minimum(c * plan.tiles_per_chunk + i,
                                         plan.tiles - 1), 0)

    in_specs = [
        pl.BlockSpec((cls_plan.row_tile, cls_plan.cols), _clamped_map(cls_plan)),
        pl.BlockSpec((cls_plan.row_tile, cls_plan.cols), _clamped_map(cls_plan)),
        pl.BlockSpec((reg_plan.row_tile, reg_plan.cols), _clamped_map(reg_plan)),
        pl.BlockSpec((reg_plan.row_tile, reg_plan.cols), _clamped_map(reg_plan)),
    ]
    out_specs = [
        pl.BlockSpec((1, 8, 128), lambda c, i: (c, 0, 0)),
        pl.BlockSpec((1, 8, 128), lambda c, i: (c, 0, 0)),
    ]
    out_shape = (jax.ShapeDtypeStruct((num_chunks, 8, 128), jnp.float32),
                 jax.ShapeDtypeStruct((num_chunks, 8, 128), jnp.float32))

    # VMEM budget: double-buffered native-dtype inputs + f32 accumulators.
    def _head_vmem(plan, p_arr, t_arr):
        blk = plan.row_tile * plan.cols
        return blk * (2 * p_arr.dtype.itemsize + 2 * t_arr.dtype.itemsize) + blk * 4
    vmem_needed = (_head_vmem(cls_plan, cls_p2, cls_t2)
                   + _head_vmem(reg_plan, reg_p2, reg_t2) + (2 << 20))
    vmem_limit = int(min(max(vmem_needed, 32 << 20), 96 << 20))

    bytes_in = sum(int(a.size) * a.dtype.itemsize
                   for a in (cls_p2, cls_t2, reg_p2, reg_t2))
    cost = pl.CostEstimate(flops=9 * n_cls + 4 * n_reg + 64,
                           transcendentals=2 * n_cls,
                           bytes_accessed=bytes_in + 2 * num_chunks * 8 * 128 * 4)

    part_cls, part_reg = pl.pallas_call(
        kernel,
        out_shape=out_shape,
        grid_spec=pltpu.PrefetchScalarGridSpec(
            num_scalar_prefetch=0,
            grid=(num_chunks, inner),
            in_specs=in_specs,
            out_specs=out_specs,
            scratch_shapes=[
                pltpu.VMEM((cls_plan.row_tile, cls_plan.cols), jnp.float32),
                pltpu.VMEM((reg_plan.row_tile, reg_plan.cols), jnp.float32),
            ]),
        compiler_params=pltpu.CompilerParams(
            dimension_semantics=("parallel", "arbitrary"),
            vmem_limit_bytes=vmem_limit),
        cost_estimate=cost,
    )(cls_p2, cls_t2, reg_p2, reg_t2)

    # Combine per-chunk partial sums; normalize by the TRUE element counts.
    cls_loss = jnp.sum(part_cls[:, 0, 0]) * (1.0 / n_cls)
    reg_loss = jnp.sum(part_reg[:, 0, 0]) * (1.0 / n_reg)
    return {"cls_loss": cls_loss, "reg_loss": reg_loss,
            "loss": w_cls * cls_loss + w_reg * reg_loss}


def _reference(out, batch):
    bce = _bce_mean(out["cls"], batch["cls"])
    mse = _mse_mean(out["reg"], batch["reg"])
    return bce, mse, LOSS_WEIGHTS["cls"] * bce + LOSS_WEIGHTS["reg"] * mse


if __name__ == "__main__":
    key = jax.random.PRNGKey(0)
    k1, k2, k3, k4 = jax.random.split(key, 4)

    B, C = 2, 32  # small demo shapes: batch=2, 32 "classes"/targets per head
    out = {"cls": jax.random.normal(k1, (B, C), dtype=jnp.float32),
           "reg": jax.random.normal(k3, (B, C), dtype=jnp.float32)}
    batch = {"cls": (jax.random.uniform(k2, (B, C)) > 0.5).astype(jnp.float32),
             "reg": jax.random.normal(k4, (B, C), dtype=jnp.float32)}

    bce_ref, mse_ref, total_ref = _reference(out, batch)

    # Force the Pallas path at the tiny demo shape (disable the bypass).
    loss_dict = combined_loss(out, batch, min_pallas_elements=0)
    jax.block_until_ready(loss_dict)
    assert jnp.allclose(loss_dict["cls_loss"], bce_ref, atol=1e-5, rtol=1e-5), "cls_loss mismatch"
    assert jnp.allclose(loss_dict["reg_loss"], mse_ref, atol=1e-5, rtol=1e-5), "reg_loss mismatch"
    assert jnp.allclose(loss_dict["loss"], total_ref, atol=1e-5, rtol=1e-5), "total loss mismatch"

    # Default dispatch at this size takes the small-size XLA bypass.
    loss_bypass = combined_loss(out, batch)
    jax.block_until_ready(loss_bypass)
    assert jnp.allclose(loss_bypass["loss"], total_ref, atol=1e-5, rtol=1e-5), "bypass mismatch"

    # Ragged, multi-tile, mixed-dtype heads: exercise row tiling, tail masks,
    # chunked accumulation and native-dtype (bf16) DMA with a small block budget.
    k5, k6, k7, k8 = jax.random.split(jax.random.PRNGKey(1), 4)
    out2 = {"cls": jax.random.normal(k5, (523, 96), dtype=jnp.float32),
            "reg": jax.random.normal(k7, (1003, 40), dtype=jnp.bfloat16)}
    batch2 = {"cls": (jax.random.uniform(k6, (523, 96)) > 0.5).astype(jnp.float32),
              "reg": jax.random.normal(k8, (1003, 40), dtype=jnp.float32)}
    ld2 = combined_loss(out2, batch2, block_budget_bytes=32 * 1024)
    jax.block_until_ready(ld2)
    b2, m2, t2 = _reference(out2, batch2)
    assert jnp.allclose(ld2["cls_loss"], b2, atol=1e-5, rtol=1e-4), "ragged cls_loss mismatch"
    assert jnp.allclose(ld2["reg_loss"], m2, atol=1e-5, rtol=1e-4), "ragged reg_loss mismatch"
    assert jnp.allclose(ld2["loss"], t2, atol=1e-5, rtol=1e-4), "ragged total loss mismatch"

    print("KERNEL_OK")
</pallas_src>

<mosaic_0001>
module attributes {stable_mosaic.version = 11 : i64} {
  func.func @_combined_loss_kernel(%arg0: i32, %arg1: i32, %arg2: memref<2x32xf32, #tpu.memory_space<vmem>>, %arg3: memref<2x32xf32, #tpu.memory_space<vmem>>, %arg4: memref<2x32xf32, #tpu.memory_space<vmem>>, %arg5: memref<2x32xf32, #tpu.memory_space<vmem>>, %arg6: memref<1x8x128xf32, #tpu.memory_space<vmem>>, %arg7: memref<1x8x128xf32, #tpu.memory_space<vmem>>, %arg8: memref<2x32xf32, #tpu.memory_space<vmem>>, %arg9: memref<2x32xf32, #tpu.memory_space<vmem>>) attributes {dimension_semantics = [#tpu.dimension_semantics<parallel>, #tpu.dimension_semantics<arbitrary>], iteration_bounds = array<i64: 2, 1>, scalar_prefetch = 0 : i64, scratch_operands = 2 : i64, tpu.core_type = #tpu.core_type<tc>, window_params = [{transform_indices = @transform_0, window_bounds = array<i64: 2, 32>}, {transform_indices = @transform_1, window_bounds = array<i64: 2, 32>}, {transform_indices = @transform_2, window_bounds = array<i64: 2, 32>}, {transform_indices = @transform_3, window_bounds = array<i64: 2, 32>}, {transform_indices = @transform_4, window_bounds = array<i64: 1, 8, 128>}, {transform_indices = @transform_5, window_bounds = array<i64: 1, 8, 128>}]} {
    %c0_i32 = arith.constant 0 : i32
    %0 = arith.cmpi eq, %arg1, %c0_i32 : i32
    %1 = arith.extui %0 : i1 to i32
    %c0_i32_0 = arith.constant 0 : i32
    %2 = arith.cmpi ne, %1, %c0_i32_0 : i32
    scf.if %2 {
      %cst = arith.constant 0.000000e+00 : f32
      %20 = vector.broadcast %cst : f32 to vector<2x32xf32>
      %c0 = arith.constant 0 : index
      %c0_10 = arith.constant 0 : index
      %21 = vector.load %arg8[%c0, %c0_10] : memref<2x32xf32, #tpu.memory_space<vmem>>, vector<2x32xf32>
      tpu.vector_store %arg8[%c0, %c0_10], %20 {strides = array<i32>} : memref<2x32xf32, #tpu.memory_space<vmem>>, vector<2x32xf32>,
      %cst_11 = arith.constant 0.000000e+00 : f32
      %22 = vector.broadcast %cst_11 : f32 to vector<2x32xf32>
      %c0_12 = arith.constant 0 : index
      %c0_13 = arith.constant 0 : index
      %23 = vector.load %arg9[%c0_12, %c0_13] : memref<2x32xf32, #tpu.memory_space<vmem>>, vector<2x32xf32>
      tpu.vector_store %arg9[%c0_12, %c0_13], %22 {strides = array<i32>} : memref<2x32xf32, #tpu.memory_space<vmem>>, vector<2x32xf32>,
    } else {
    }
    %c1_i32 = arith.constant 1 : i32
    %3 = arith.muli %arg0, %c1_i32 : i32
    %4 = arith.addi %3, %arg1 : i32
    %c1_i32_1 = arith.constant 1 : i32
    %5 = arith.cmpi slt, %arg1, %c1_i32_1 : i32
    %c1_i32_2 = arith.constant 1 : i32
    %6 = arith.cmpi slt, %4, %c1_i32_2 : i32
    %7 = arith.andi %5, %6 : i1
    %8 = arith.extui %7 : i1 to i32
    %c0_i32_3 = arith.constant 0 : i32
    %9 = arith.cmpi ne, %8, %c0_i32_3 : i32
    scf.if %9 {
      %c0 = arith.constant 0 : index
      %c0_10 = arith.constant 0 : index
      %20 = vector.load %arg2[%c0, %c0_10] : memref<2x32xf32, #tpu.memory_space<vmem>>, vector<2x32xf32>
      %c0_11 = arith.constant 0 : index
      %c0_12 = arith.constant 0 : index
      %21 = vector.load %arg3[%c0_11, %c0_12] : memref<2x32xf32, #tpu.memory_space<vmem>>, vector<2x32xf32>
      %cst = arith.constant 0.000000e+00 : f32
      %22 = vector.broadcast %cst : f32 to vector<2x32xf32>
      %23 = arith.maximumf %20, %22 : vector<2x32xf32>
      %24 = arith.mulf %20, %21 : vector<2x32xf32>
      %25 = arith.subf %23, %24 : vector<2x32xf32>
      %26 = math.absf %20 : vector<2x32xf32>
      %cst_13 = arith.constant 0.000000e+00 : f32
      %27 = vector.broadcast %cst_13 : f32 to vector<2x32xf32>
      %28 = arith.subf %27, %26 : vector<2x32xf32>
      %29 = math.exp %28 : vector<2x32xf32>
      %30 = math.log1p %29 : vector<2x32xf32>
      %31 = arith.addf %25, %30 : vector<2x32xf32>
      %c0_14 = arith.constant 0 : index
      %c0_15 = arith.constant 0 : index
      %32 = vector.load %arg8[%c0_14, %c0_15] : memref<2x32xf32, #tpu.memory_space<vmem>>, vector<2x32xf32>
      %33 = arith.addf %32, %31 : vector<2x32xf32>
      %c0_16 = arith.constant 0 : index
      %c0_17 = arith.constant 0 : index
      %34 = vector.load %arg8[%c0_16, %c0_17] : memref<2x32xf32, #tpu.memory_space<vmem>>, vector<2x32xf32>
      tpu.vector_store %arg8[%c0_16, %c0_17], %33 {strides = array<i32>} : memref<2x32xf32, #tpu.memory_space<vmem>>, vector<2x32xf32>,
    } else {
    }
    %c1_i32_4 = arith.constant 1 : i32
    %10 = arith.muli %arg0, %c1_i32_4 : i32
    %11 = arith.addi %10, %arg1 : i32
    %c1_i32_5 = arith.constant 1 : i32
    %12 = arith.cmpi slt, %arg1, %c1_i32_5 : i32
    %c1_i32_6 = arith.constant 1 : i32
    %13 = arith.cmpi slt, %11, %c1_i32_6 : i32
    %14 = arith.andi %12, %13 : i1
    %15 = arith.extui %14 : i1 to i32
    %c0_i32_7 = arith.constant 0 : i32
    %16 = arith.cmpi ne, %15, %c0_i32_7 : i32
    scf.if %16 {
      %c0 = arith.constant 0 : index
      %c0_10 = arith.constant 0 : index
      %20 = vector.load %arg4[%c0, %c0_10] : memref<2x32xf32, #tpu.memory_space<vmem>>, vector<2x32xf32>
      %c0_11 = arith.constant 0 : index
      %c0_12 = arith.constant 0 : index
      %21 = vector.load %arg5[%c0_11, %c0_12] : memref<2x32xf32, #tpu.memory_space<vmem>>, vector<2x32xf32>
      %22 = arith.subf %20, %21 : vector<2x32xf32>
      %23 = arith.mulf %22, %22 : vector<2x32xf32>
      %c0_13 = arith.constant 0 : index
      %c0_14 = arith.constant 0 : index
      %24 = vector.load %arg9[%c0_13, %c0_14] : memref<2x32xf32, #tpu.memory_space<vmem>>, vector<2x32xf32>
      %25 = arith.addf %24, %23 : vector<2x32xf32>
      %c0_15 = arith.constant 0 : index
      %c0_16 = arith.constant 0 : index
      %26 = vector.load %arg9[%c0_15, %c0_16] : memref<2x32xf32, #tpu.memory_space<vmem>>, vector<2x32xf32>
      tpu.vector_store %arg9[%c0_15, %c0_16], %25 {strides = array<i32>} : memref<2x32xf32, #tpu.memory_space<vmem>>, vector<2x32xf32>,
    } else {
    }
    %c0_i32_8 = arith.constant 0 : i32
    %17 = arith.cmpi eq, %arg1, %c0_i32_8 : i32
    %18 = arith.extui %17 : i1 to i32
    %c0_i32_9 = arith.constant 0 : i32
    %19 = arith.cmpi ne, %18, %c0_i32_9 : i32
    scf.if %19 {
      %c0 = arith.constant 0 : index
      %c0_10 = arith.constant 0 : index
      %20 = vector.load %arg8[%c0, %c0_10] : memref<2x32xf32, #tpu.memory_space<vmem>>, vector<2x32xf32>
      %21 = vector.shape_cast %20 : vector<2x32xf32> to vector<1x2x32xf32>
      %cst = arith.constant dense<0.000000e+00> : vector<1xf32>
      %22 = vector.multi_reduction <add>, %21, %cst [1, 2] : vector<1x2x32xf32> to vector<1xf32>
      %23 = vector.shape_cast %22 : vector<1xf32> to vector<1x1x1xf32>
      %24 = vector.extract %23[0, 0, 0] : f32 from vector<1x1x1xf32>
      %25 = vector.broadcast %24 : f32 to vector<1x8x128xf32>
      %c0_11 = arith.constant 0 : index
      %c0_12 = arith.constant 0 : index
      %c0_13 = arith.constant 0 : index
      %26 = vector.load %arg6[%c0_11, %c0_12, %c0_13] : memref<1x8x128xf32, #tpu.memory_space<vmem>>, vector<1x8x128xf32>
      tpu.vector_store %arg6[%c0_11, %c0_12, %c0_13], %25 {strides = array<i32>} : memref<1x8x128xf32, #tpu.memory_space<vmem>>, vector<1x8x128xf32>,
      %c0_14 = arith.constant 0 : index
      %c0_15 = arith.constant 0 : index
      %27 = vector.load %arg9[%c0_14, %c0_15] : memref<2x32xf32, #tpu.memory_space<vmem>>, vector<2x32xf32>
      %28 = vector.shape_cast %27 : vector<2x32xf32> to vector<1x2x32xf32>
      %cst_16 = arith.constant dense<0.000000e+00> : vector<1xf32>
      %29 = vector.multi_reduction <add>, %28, %cst_16 [1, 2] : vector<1x2x32xf32> to vector<1xf32>
      %30 = vector.shape_cast %29 : vector<1xf32> to vector<1x1x1xf32>
      %31 = vector.extract %30[0, 0, 0] : f32 from vector<1x1x1xf32>
      %32 = vector.broadcast %31 : f32 to vector<1x8x128xf32>
      %c0_17 = arith.constant 0 : index
      %c0_18 = arith.constant 0 : index
      %c0_19 = arith.constant 0 : index
      %33 = vector.load %arg7[%c0_17, %c0_18, %c0_19] : memref<1x8x128xf32, #tpu.memory_space<vmem>>, vector<1x8x128xf32>
      tpu.vector_store %arg7[%c0_17, %c0_18, %c0_19], %32 {strides = array<i32>} : memref<1x8x128xf32, #tpu.memory_space<vmem>>, vector<1x8x128xf32>,
    } else {
    }
    return
  }
  func.func @transform_0(%arg0: i32, %arg1: i32) -> (i32, i32) {
    %c1_i32 = arith.constant 1 : i32
    %0 = arith.muli %arg0, %c1_i32 : i32
    %1 = arith.addi %0, %arg1 : i32
    %c0_i32 = arith.constant 0 : i32
    %2 = arith.minsi %1, %c0_i32 : i32
    %c0_i32_0 = arith.constant 0 : i32
    %c0_i32_1 = arith.constant 0 : i32
    return %2, %c0_i32_0 : i32, i32
  }
  func.func @transform_1(%arg0: i32, %arg1: i32) -> (i32, i32) {
    %c1_i32 = arith.constant 1 : i32
    %0 = arith.muli %arg0, %c1_i32 : i32
    %1 = arith.addi %0, %arg1 : i32
    %c0_i32 = arith.constant 0 : i32
    %2 = arith.minsi %1, %c0_i32 : i32
    %c0_i32_0 = arith.constant 0 : i32
    %c0_i32_1 = arith.constant 0 : i32
    return %2, %c0_i32_0 : i32, i32
  }
  func.func @transform_2(%arg0: i32, %arg1: i32) -> (i32, i32) {
    %c1_i32 = arith.constant 1 : i32
    %0 = arith.muli %arg0, %c1_i32 : i32
    %1 = arith.addi %0, %arg1 : i32
    %c0_i32 = arith.constant 0 : i32
    %2 = arith.minsi %1, %c0_i32 : i32
    %c0_i32_0 = arith.constant 0 : i32
    %c0_i32_1 = arith.constant 0 : i32
    return %2, %c0_i32_0 : i32, i32
  }
  func.func @transform_3(%arg0: i32, %arg1: i32) -> (i32, i32) {
    %c1_i32 = arith.constant 1 : i32
    %0 = arith.muli %arg0, %c1_i32 : i32
    %1 = arith.addi %0, %arg1 : i32
    %c0_i32 = arith.constant 0 : i32
    %2 = arith.minsi %1, %c0_i32 : i32
    %c0_i32_0 = arith.constant 0 : i32
    %c0_i32_1 = arith.constant 0 : i32
    return %2, %c0_i32_0 : i32, i32
  }
  func.func @transform_4(%arg0: i32, %arg1: i32) -> (i32, i32, i32) {
    %c0_i32 = arith.constant 0 : i32
    %c0_i32_0 = arith.constant 0 : i32
    %c0_i32_1 = arith.constant 0 : i32
    return %arg0, %c0_i32, %c0_i32_0 : i32, i32, i32
  }
  func.func @transform_5(%arg0: i32, %arg1: i32) -> (i32, i32, i32) {
    %c0_i32 = arith.constant 0 : i32
    %c0_i32_0 = arith.constant 0 : i32
    %c0_i32_1 = arith.constant 0 : i32
    return %arg0, %c0_i32, %c0_i32_0 : i32, i32, i32
  }
}

</mosaic_0001>

<llo_original>
// kernel: tpu_custom_call.1
$region0: #{tpu_custom_call.1}
  #allocation0 [shape = 'u32[]', space=smem, size = 0x4, offset = 0x4, fixed_abs, tag = 'smem constant byte address 0x4 - core index']
  #allocation1 [shape = 'u32[72,128]{1,0:T(1,128)}', space=vmem, size = 0x9000, scoped, tag = 'internal scratch']
  #allocation2 [shape = 'f32[2,32]{1,0:T(2,128)}', space=vmem, size = 0x400, scoped, tag = 'scratch operand']
  #allocation3 [shape = 'f32[2,32]{1,0:T(2,128)}', space=vmem, size = 0x400, scoped, tag = 'scratch operand']
  %s0 = inlined_call_operand.hbm [shape: f32[2,32], index: 0, kind: input, shape index: {}]
  %s1 = inlined_call_operand.hbm [shape: f32[2,32], index: 1, kind: input, shape index: {}]
  %s2 = inlined_call_operand.hbm [shape: f32[2,32], index: 2, kind: input, shape index: {}]
  %s3 = inlined_call_operand.vmem [shape: f32[2,32], index: 3, kind: input, shape index: {}]
  %s4 = inlined_call_operand.hbm [shape: f32[2,8,128], index: 4, kind: output, shape index: {0}]
  %s5 = inlined_call_operand.hbm [shape: f32[2,8,128], index: 5, kind: output, shape index: {1}]
  %6 = xla_tuple %s4, %s5
  %s7 = sld [smem:[#allocation0]]
  $region81: #{tpu_custom_call.1} parent=0
    _
  %s9 = ssub.s32 1, %s7
  %s10 = scalar_select 0, %s9, %s7
  $region1: #{tpu_custom_call.1} parent=0
    #allocation4 [shape = 'u8[2048]{0}', space=vmem, size = 0x800, scoped, tag = 'input window, operand 0']
    #allocation5 [shape = 's32[2]{0}', space=sflag, size = 0x8, scoped, tag = 'scoped memory for tpu_custom_call.1']
    #allocation6 [shape = 's32[2]{0}', space=sflag, size = 0x8, scoped, tag = 'scoped memory for tpu_custom_call.1']
    #allocation7 [shape = 'u8[2048]{0}', space=vmem, size = 0x800, scoped, tag = 'input window, operand 1']
    #allocation8 [shape = 's32[2]{0}', space=sflag, size = 0x8, scoped, tag = 'scoped memory for tpu_custom_call.1']
    #allocation9 [shape = 'u8[2048]{0}', space=vmem, size = 0x800, scoped, tag = 'input window, operand 2']
    #allocation10 [shape = 'u8[8192]{0}', space=vmem, size = 0x2000, scoped, tag = 'output window, operand 0']
    #allocation11 [shape = 'u8[8192]{0}', space=vmem, size = 0x2000, scoped, tag = 'output window, operand 1']
    #allocation12 [shape = 's32[2]{0}', space=sflag, size = 0x8, scoped, tag = 'scoped memory for tpu_custom_call.1']
    %11 = vsyncpa [#allocation5], 0
    %s12 = scalar_lea.sflag [#allocation5], 1
    %13 = vsyncpa %s12, 0
    %14 = vsyncpa [#allocation8], 0
    %s15 = scalar_lea.sflag [#allocation8], 1
    %16 = vsyncpa %s15, 0
    %17 = vsyncpa [#allocation6], 0
    %s18 = scalar_lea.sflag [#allocation6], 1
    %19 = vsyncpa %s18, 0
    %20 = vsyncpa [#allocation12], 0
    %s21 = scalar_lea.sflag [#allocation12], 1
    %22 = vsyncpa %s21, 0
    loop: start=0, step=1, limit=4
    $region2: #{tpu_custom_call.1} parent=1 // loop_pre_header
      _
    $region3: #{tpu_custom_call.1} parent=1 // loop_header
      %s24 = sphi 0, %s28
      %p25 = scmp.ge.s32.totalorder %s24, 4
      %s31 = sphi 0, %s43
      %s32 = sphi 0, %s39
      %s33 = sphi 0, %s31
      %s34 = sphi 0, %s32
      %s35 = sphi 0, %s33
      %s36 = sphi 0, %s34
      %s52 = sphi 0, %s54
      %s55 = sphi 0, %s52
      %s56 = sphi 0, %s55
      %s72 = sphi 0, %s56
      %s84 = sphi 0, %s86
      %s87 = sphi 0, %s84
      %s88 = sphi 0, %s87
      %s104 = sphi 0, %s88
      %s116 = sphi 0, %s118
      %s119 = sphi 0, %s116
      %s120 = sphi 0, %s119
      %s136 = sphi 0, %s120
      %s148 = sphi 0, %s150
      %s151 = sphi 0, %s148
      %s152 = sphi 0, %s151
      %s168 = sphi 0, %s152
      %s174 = sphi 0, %s176
      %s177 = sphi 0, %s174
      %s178 = sphi 0, %s177
      %s194 = sphi 0, %s178
      %s200 = sphi 0, %s202
      %s203 = sphi 0, %s200
      %s204 = sphi 0, %s203
      %s220 = sphi 0, %s204
    $region4: #{tpu_custom_call.1} parent=1 // loop_header_branch
      %27 = sbr.rel (%p25) target = $region8
    $region5: #{tpu_custom_call.1} parent=1 // loop_body
      %s29 = ssub.s32 %s24, 1
      %s30 = ssub.s32 %s24, 2
      %s37 = sadd.s32 1, %s32
      %p38 = scmp.ge.s32.totalorder %s37, 1
      %s39 = scalar_select %p38, 0, %s37
      %s40 = sadd.s32 1, %s31
      %s41 = scalar_select %p38, %s40, %s31
      %p42 = scmp.ge.s32.totalorder %s41, 2
      %s43 = scalar_select %p42, 0, %s41
      %s44 = sadd.s32 %s31, %s32
      %p45 = scmp.lt.s32.totalorder %s44, 0
      %s46 = scalar_select %p45, %s44, 0
      %s47 = sadd.s32 %s43, %s39
      %p48 = scmp.lt.s32.totalorder %s47, 0
      %s49 = scalar_select %p48, %s47, 0
      %s50 = ssub.s32 %s46, %s49
      %p51 = scmp.eq.s32.totalorder %s50, 0
      %s53 = sadd.s32 %s52, 1
      %s54 = scalar_select %p51, %s52, %s53
      %p57 = pneg %p51
      %p58 = scmp.eq.s32.totalorder %s24, 1
      %p59 = por %p57, %p58
      %p60 = scmp.ne.s32.totalorder %s52, %s55
      %p61 = scmp.eq.s32.totalorder %s24, 0
      %p62 = por %p60, %p61
      %p63 = scmp.ne.s32.totalorder %s52, %s55
      %p64 = scmp.eq.s32.totalorder %s29, 1
      %p65 = por %p63, %p64
      %p66 = scmp.ne.s32.totalorder %s55, %s56
      %p67 = scmp.eq.s32.totalorder %s29, 0
      %p68 = por %p66, %p67
      %p69 = scmp.ne.s32.totalorder %s55, %s56
      %p70 = scmp.eq.s32.totalorder %s30, 1
      %p71 = por %p69, %p70
      %p73 = scmp.ne.s32.totalorder %s56, %s72
      %p74 = scmp.eq.s32.totalorder %s30, 0
      %p75 = por %p73, %p74
      %s76 = sadd.s32 %s31, %s32
      %p77 = scmp.lt.s32.totalorder %s76, 0
      %s78 = scalar_select %p77, %s76, 0
      %s79 = sadd.s32 %s43, %s39
      %p80 = scmp.lt.s32.totalorder %s79, 0
      %s81 = scalar_select %p80, %s79, 0
      %s82 = ssub.s32 %s78, %s81
      %p83 = scmp.eq.s32.totalorder %s82, 0
      %s85 = sadd.s32 %s84, 1
      %s86 = scalar_select %p83, %s84, %s85
      %p89 = pneg %p83
      %p90 = scmp.eq.s32.totalorder %s24, 1
      %p91 = por %p89, %p90
      %p92 = scmp.ne.s32.totalorder %s84, %s87
      %p93 = scmp.eq.s32.totalorder %s24, 0
      %p94 = por %p92, %p93
      %p95 = scmp.ne.s32.totalorder %s84, %s87
      %p96 = scmp.eq.s32.totalorder %s29, 1
      %p97 = por %p95, %p96
      %p98 = scmp.ne.s32.totalorder %s87, %s88
      %p99 = scmp.eq.s32.totalorder %s29, 0
      %p100 = por %p98, %p99
      %p101 = scmp.ne.s32.totalorder %s87, %s88
      %p102 = scmp.eq.s32.totalorder %s30, 1
      %p103 = por %p101, %p102
      %p105 = scmp.ne.s32.totalorder %s88, %s104
      %p106 = scmp.eq.s32.totalorder %s30, 0
      %p107 = por %p105, %p106
      %s108 = sadd.s32 %s31, %s32
      %p109 = scmp.lt.s32.totalorder %s108, 0
      %s110 = scalar_select %p109, %s108, 0
      %s111 = sadd.s32 %s43, %s39
      %p112 = scmp.lt.s32.totalorder %s111, 0
      %s113 = scalar_select %p112, %s111, 0
      %s114 = ssub.s32 %s110, %s113
      %p115 = scmp.eq.s32.totalorder %s114, 0
      %s117 = sadd.s32 %s116, 1
      %s118 = scalar_select %p115, %s116, %s117
      %p121 = pneg %p115
      %p122 = scmp.eq.s32.totalorder %s24, 1
      %p123 = por %p121, %p122
      %p124 = scmp.ne.s32.totalorder %s116, %s119
      %p125 = scmp.eq.s32.totalorder %s24, 0
      %p126 = por %p124, %p125
      %p127 = scmp.ne.s32.totalorder %s116, %s119
      %p128 = scmp.eq.s32.totalorder %s29, 1
      %p129 = por %p127, %p128
      %p130 = scmp.ne.s32.totalorder %s119, %s120
      %p131 = scmp.eq.s32.totalorder %s29, 0
      %p132 = por %p130, %p131
      %p133 = scmp.ne.s32.totalorder %s119, %s120
      %p134 = scmp.eq.s32.totalorder %s30, 1
      %p135 = por %p133, %p134
      %p137 = scmp.ne.s32.totalorder %s120, %s136
      %p138 = scmp.eq.s32.totalorder %s30, 0
      %p139 = por %p137, %p138
      %s140 = sadd.s32 %s31, %s32
      %p141 = scmp.lt.s32.totalorder %s140, 0
      %s142 = scalar_select %p141, %s140, 0
      %s143 = sadd.s32 %s43, %s39
      %p144 = scmp.lt.s32.totalorder %s143, 0
      %s145 = scalar_select %p144, %s143, 0
      %s146 = ssub.s32 %s142, %s145
      %p147 = scmp.eq.s32.totalorder %s146, 0
      %s149 = sadd.s32 %s148, 1
      %s150 = scalar_select %p147, %s148, %s149
      %p153 = pneg %p147
      %p154 = scmp.eq.s32.totalorder %s24, 1
      %p155 = por %p153, %p154
      %p156 = scmp.ne.s32.totalorder %s148, %s151
      %p157 = scmp.eq.s32.totalorder %s24, 0
      %p158 = por %p156, %p157
      %p159 = scmp.ne.s32.totalorder %s148, %s151
      %p160 = scmp.eq.s32.totalorder %s29, 1
      %p161 = por %p159, %p160
      %p162 = scmp.ne.s32.totalorder %s151, %s152
      %p163 = scmp.eq.s32.totalorder %s29, 0
      %p164 = por %p162, %p163
      %p165 = scmp.ne.s32.totalorder %s151, %s152
      %p166 = scmp.eq.s32.totalorder %s30, 1
      %p167 = por %p165, %p166
      %p169 = scmp.ne.s32.totalorder %s152, %s168
      %p170 = scmp.eq.s32.totalorder %s30, 0
      %p171 = por %p169, %p170
      %s172 = ssub.s32 %s31, %s43
      %p173 = scmp.eq.s32.totalorder %s172, 0
      %s175 = sadd.s32 %s174, 1
      %s176 = scalar_select %p173, %s174, %s175
      %p179 = pneg %p173
      %p180 = scmp.eq.s32.totalorder %s24, 1
      %p181 = por %p179, %p180
      %p182 = scmp.ne.s32.totalorder %s174, %s177
      %p183 = scmp.eq.s32.totalorder %s24, 0
      %p184 = por %p182, %p183
      %p185 = scmp.ne.s32.totalorder %s174, %s177
      %p186 = scmp.eq.s32.totalorder %s29, 1
      %p187 = por %p185, %p186
      %p188 = scmp.ne.s32.totalorder %s177, %s178
      %p189 = scmp.eq.s32.totalorder %s29, 0
      %p190 = por %p188, %p189
      %p191 = scmp.ne.s32.totalorder %s177, %s178
      %p192 = scmp.eq.s32.totalorder %s30, 1
      %p193 = por %p191, %p192
      %p195 = scmp.ne.s32.totalorder %s178, %s194
      %p196 = scmp.eq.s32.totalorder %s30, 0
      %p197 = por %p195, %p196
      %s198 = ssub.s32 %s31, %s43
      %p199 = scmp.eq.s32.totalorder %s198, 0
      %s201 = sadd.s32 %s200, 1
      %s202 = scalar_select %p199, %s200, %s201
      %p205 = pneg %p199
      %p206 = scmp.eq.s32.totalorder %s24, 1
      %p207 = por %p205, %p206
      %p208 = scmp.ne.s32.totalorder %s200, %s203
      %p209 = scmp.eq.s32.totalorder %s24, 0
      %p210 = por %p208, %p209
      %p211 = scmp.ne.s32.totalorder %s200, %s203
      %p212 = scmp.eq.s32.totalorder %s29, 1
      %p213 = por %p211, %p212
      %p214 = scmp.ne.s32.totalorder %s203, %s204
      %p215 = scmp.eq.s32.totalorder %s29, 0
      %p216 = por %p214, %p215
      %p217 = scmp.ne.s32.totalorder %s203, %s204
      %p218 = scmp.eq.s32.totalorder %s30, 1
      %p219 = por %p217, %p218
      %p221 = scmp.ne.s32.totalorder %s204, %s220
      %p222 = scmp.eq.s32.totalorder %s30, 0
      %p223 = por %p221, %p222
      %p224 = scmp.le.s32.totalorder 1, %s24
      %p225 = scmp.lt.s32.totalorder %s24, 3
      %p226 = pnand %p224, %p225
      %p227 = pneg %p226
      // Predicated region
      $region9: #{tpu_custom_call.1} parent=5 // pred_check
        _
      $region10: #{tpu_custom_call.1} parent=5 // pred_check_branch
        %229 = sbr.rel (%p226) target = $region12
      $region11: #{tpu_custom_call.1} parent=5 // pred_region
        %s230 = ssub.s32 %s24, 1
      $region12: #{tpu_custom_call.1} parent=5 // pred_fallthru
        _
      %p231 = scmp.lt.s32.totalorder %s24, 2
      // Predicated region
      $region13: #{tpu_custom_call.1} parent=5 // pred_check
        %p232 = pneg %p231
      $region14: #{tpu_custom_call.1} parent=5 // pred_check_branch
        %234 = sbr.rel (%p232) target = $region16
      $region15: #{tpu_custom_call.1} parent=5 // pred_region
        // Predicated region
        $region17: #{tpu_custom_call.1} parent=15 // pred_check
          %p235 = pneg %p62
        $region18: #{tpu_custom_call.1} parent=15 // pred_check_branch
          %237 = sbr.rel (%p235) target = $region20
        $region19: #{tpu_custom_call.1} parent=15 // pred_region
          %s238 = sand.u32 %s52, 1
          %s239 = scalar_lea.sflag [#allocation5], %s238
          %s240 = sand.u32 %s52, 1
          %s241 = smul.addr %s240, 2
          %s242 = scalar_lea.vmem [#allocation4], %s241
          %s243 = sadd.s32 %s31, %s32
          %p244 = scmp.lt.s32.totalorder %s243, 0
          %s245 = scalar_select %p244, %s243, 0
          %247 = vsyncadd %s239, 0
          %s248 = smul.addr %s245, 2
          %s249 = scalar_lea.hbm %s0, %s248
          %s251 = sshll.u32 %s249, 4
          %s252 = int_to_ptr.hbm [resolvable:$true] %s251
          %s253 = sshll.u32 %s242, 4
          %s254 = int_to_ptr.vmem [resolvable:$true] %s253
          %256 = dma.hbm_to_vmem [thread:$0]  %s252, 32, %s254, %s239
        $region20: #{tpu_custom_call.1} parent=15 // pred_fallthru
          _
        // Predicated region
        $region21: #{tpu_custom_call.1} parent=15 // pred_check
          %p257 = pneg %p94
        $region22: #{tpu_custom_call.1} parent=15 // pred_check_branch
          %259 = sbr.rel (%p257) target = $region24
        $region23: #{tpu_custom_call.1} parent=15 // pred_region
          %s260 = sand.u32 %s24, 1
          %s261 = scalar_lea.sflag [#allocation8], %s260
          %s262 = sand.u32 %s84, 1
          %s263 = smul.addr %s262, 2
          %s264 = scalar_lea.vmem [#allocation7], %s263
          %s265 = sadd.s32 %s31, %s32
          %p266 = scmp.lt.s32.totalorder %s265, 0
          %s267 = scalar_select %p266, %s265, 0
          %269 = vsyncadd %s261, 0
          %s270 = smul.addr %s267, 2
          %s271 = scalar_lea.hbm %s1, %s270
          %s273 = sshll.u32 %s271, 4
          %s274 = int_to_ptr.hbm [resolvable:$true] %s273
          %s275 = sshll.u32 %s264, 4
          %s276 = int_to_ptr.vmem [resolvable:$true] %s275
          %278 = dma.hbm_to_vmem [thread:$0]  %s274, 32, %s276, %s261
        $region24: #{tpu_custom_call.1} parent=15 // pred_fallthru
          _
        // Predicated region
        $region25: #{tpu_custom_call.1} parent=15 // pred_check
          %p279 = pneg %p126
        $region26: #{tpu_custom_call.1} parent=15 // pred_check_branch
          %281 = sbr.rel (%p279) target = $region28
        $region27: #{tpu_custom_call.1} parent=15 // pred_region
          %s282 = sand.u32 %s24, 1
          %s283 = scalar_lea.sflag [#allocation8], %s282
          %s284 = sand.u32 %s116, 1
          %s285 = smul.addr %s284, 2
          %s286 = scalar_lea.vmem [#allocation9], %s285
          %s287 = sadd.s32 %s31, %s32
          %p288 = scmp.lt.s32.totalorder %s287, 0
          %s289 = scalar_select %p288, %s287, 0
          %291 = vsyncadd %s283, 0
          %s292 = smul.addr %s289, 2
          %s293 = scalar_lea.hbm %s2, %s292
          %s295 = sshll.u32 %s293, 4
          %s296 = int_to_ptr.hbm [resolvable:$true] %s295
          %s297 = sshll.u32 %s286, 4
          %s298 = int_to_ptr.vmem [resolvable:$true] %s297
          %300 = dma.hbm_to_vmem [thread:$0]  %s296, 32, %s298, %s283
        $region28: #{tpu_custom_call.1} parent=15 // pred_fallthru
          _
        // Predicated region
        $region29: #{tpu_custom_call.1} parent=15 // pred_check
          %p301 = pneg %p158
        $region30: #{tpu_custom_call.1} parent=15 // pred_check_branch
          %303 = sbr.rel (%p301) target = $region32
        $region31: #{tpu_custom_call.1} parent=15 // pred_region
          %s304 = sadd.s32 %s31, %s32
          %p305 = scmp.lt.s32.totalorder %s304, 0
          %s306 = scalar_select %p305, %s304, 0
          %p307 = scmp.lt.s32.totalorder %s306, 0
          %s308 = scalar_select %p307, %s306, 0
          %s309 = smul.addr %s308, 2
          %s310 = scalar_lea.vmem %s3, %s309
          %s311 = sadd.s32 %s31, %s32
          %p312 = scmp.lt.s32.totalorder %s311, 0
          %s313 = scalar_select %p312, %s311, 0
        $region32: #{tpu_custom_call.1} parent=15 // pred_fallthru
          _
      $region16: #{tpu_custom_call.1} parent=5 // pred_fallthru
        _
      %p314 = scmp.le.s32.totalorder 1, %s24
      %p315 = scmp.lt.s32.totalorder %s24, 3
      %p316 = pnand %p314, %p315
      %p317 = pneg %p316
      // Predicated region
      $region33: #{tpu_custom_call.1} parent=5 // pred_check
        _
      $region34: #{tpu_custom_call.1} parent=5 // pred_check_branch
        %319 = sbr.rel (%p316) target = $region36
      $region35: #{tpu_custom_call.1} parent=5 // pred_region
        %s320 = ssub.s32 %s24, 1
        %s321 = sand.u32 %s55, 1
        %s322 = scalar_lea.sflag [#allocation5], %s321
        %s323 = sand.u32 %s55, 1
        %s324 = smul.addr %s323, 2
        %s325 = scalar_lea.vmem [#allocation4], %s324
        // Predicated region
        $region37: #{tpu_custom_call.1} parent=35 // pred_check
          %p326 = pneg %p68
        $region38: #{tpu_custom_call.1} parent=35 // pred_check_branch
          %328 = sbr.rel (%p326) target = $region40
        $region39: #{tpu_custom_call.1} parent=35 // pred_region
          %330 = dma.done %s322, 32
        $region40: #{tpu_custom_call.1} parent=35 // pred_fallthru
          _
        %s331 = sand.u32 %s29, 1
        %s332 = scalar_lea.sflag [#allocation8], %s331
        %s333 = sand.u32 %s87, 1
        %s334 = smul.addr %s333, 2
        %s335 = scalar_lea.vmem [#allocation7], %s334
        // Predicated region
        $region41: #{tpu_custom_call.1} parent=35 // pred_check
          %p336 = pneg %p100
        $region42: #{tpu_custom_call.1} parent=35 // pred_check_branch
          %338 = sbr.rel (%p336) target = $region44
        $region43: #{tpu_custom_call.1} parent=35 // pred_region
          %340 = dma.done %s332, 32
        $region44: #{tpu_custom_call.1} parent=35 // pred_fallthru
          _
        %s341 = sand.u32 %s29, 1
        %s342 = scalar_lea.sflag [#allocation8], %s341
        %s343 = sand.u32 %s119, 1
        %s344 = smul.addr %s343, 2
        %s345 = scalar_lea.vmem [#allocation9], %s344
        // Predicated region
        $region45: #{tpu_custom_call.1} parent=35 // pred_check
          %p346 = pneg %p132
        $region46: #{tpu_custom_call.1} parent=35 // pred_check_branch
          %348 = sbr.rel (%p346) target = $region48
        $region47: #{tpu_custom_call.1} parent=35 // pred_region
          %350 = dma.done %s342, 32
        $region48: #{tpu_custom_call.1} parent=35 // pred_fallthru
          _
        %s351 = sand.u32 %s55, 1
        %s352 = scalar_lea.sflag [#allocation5], %s351
        %s353 = sand.u32 %s55, 1
        %s354 = smul.addr %s353, 2
        %s355 = scalar_lea.vmem [#allocation4], %s354
        %p356 = pneg %p68
        %p357 = pneg %p65
        %s358 = sand.u32 %s29, 1
        %s359 = scalar_lea.sflag [#allocation8], %s358
        %s360 = sand.u32 %s87, 1
        %s361 = smul.addr %s360, 2
        %s362 = scalar_lea.vmem [#allocation7], %s361
        %p363 = pneg %p100
        %p364 = pneg %p97
        %s365 = sand.u32 %s29, 1
        %s366 = scalar_lea.sflag [#allocation8], %s365
        %s367 = sand.u32 %s119, 1
        %s368 = smul.addr %s367, 2
        %s369 = scalar_lea.vmem [#allocation9], %s368
        %p370 = pneg %p132
        %p371 = pneg %p129
        %s372 = sadd.s32 %s33, %s34
        %p373 = scmp.lt.s32.totalorder %s372, 0
        %s374 = scalar_select %p373, %s372, 0
        %p375 = scmp.lt.s32.totalorder %s374, 0
        %s376 = scalar_select %p375, %s374, 0
        %s377 = smul.addr %s376, 2
        %s378 = scalar_lea.vmem %s3, %s377
        %p379 = pneg %p164
        %p380 = pneg %p161
        %p381 = pneg %p190
        %p382 = pneg %p187
        %s383 = sand.u32 %s177, 1
        %s384 = scalar_lea.sflag [#allocation6], %s383
        %s385 = sand.u32 %s177, 1
        %s386 = smul.addr %s385, 8
        %s387 = scalar_lea.vmem [#allocation10], %s386
        %p388 = pneg %p216
        %p389 = pneg %p213
        %s390 = sand.u32 %s203, 1
        %s391 = scalar_lea.sflag [#allocation12], %s390
        %s392 = sand.u32 %s203, 1
        %s393 = smul.addr %s392, 8
        %s394 = scalar_lea.vmem [#allocation11], %s393
        %s395 = sadd.s32 %s33, %s34
        %p396 = scmp.lt.s32.totalorder %s395, 0
        %s397 = scalar_select %p396, %s395, 0
        %s398 = sadd.s32 %s33, %s34
        %p399 = scmp.lt.s32.totalorder %s398, 0
        %s400 = scalar_select %p399, %s398, 0
        %s401 = sadd.s32 %s33, %s34
        %p402 = scmp.lt.s32.totalorder %s401, 0
        %s403 = scalar_select %p402, %s401, 0
        %s404 = sadd.s32 %s33, %s34
        %p405 = scmp.lt.s32.totalorder %s404, 0
        %s406 = scalar_select %p405, %s404, 0
        %p407 = scmp.lt.s32.totalorder %s406, 0
        %s408 = scalar_select %p407, %s406, 0
        %s409 = smul.addr %s408, 2
        %s410 = scalar_lea.vmem %s3, %s409
        %s411 = sadd.s32 %s33, %s34
        %p412 = scmp.lt.s32.totalorder %s411, 0
        %s413 = scalar_select %p412, %s411, 0
        %p414 = scmp.eq.s32.totalorder %s34, 0
        // Predicated region
        $region49: #{tpu_custom_call.1} parent=35 // pred_check
          %p415 = pneg %p414
        $region50: #{tpu_custom_call.1} parent=35 // pred_check_branch
          %417 = sbr.rel (%p415) target = $region52
        $region51: #{tpu_custom_call.1} parent=35 // pred_region
          %vm418 = vcmask 254976
          %419 = vst.msk [vmem:[#allocation2] sm:$0x3] %vm418, 0.0
          %420 = vst.msk [vmem:[#allocation3] sm:$0x3] %vm418, 0.0
        $region52: #{tpu_custom_call.1} parent=35 // pred_fallthru
          _
        %s421 = sadd.s32 %s33, %s34
        %p422 = scmp.lt.s32.totalorder %s34, 1
        %p423 = scmp.lt.s32.totalorder %s421, 1
        %p424 = pnand %p422, %p423
        %p425 = pneg %p424
        // Predicated region
        $region53: #{tpu_custom_call.1} parent=35 // pred_check
          _
        $region54: #{tpu_custom_call.1} parent=35 // pred_check_branch
          %427 = sbr.rel (%p424) target = $region56
        $region55: #{tpu_custom_call.1} parent=35 // pred_region
          %v428 = vld [vmem:[%s325] sm:$0x3]
          %v429 = vld [vmem:[%s335] sm:$0x3]
          %v430 = vmax.f32 %v428, 0.0
          %v431 = vmul.f32 %v428, %v429
          %v432 = vsub.f32 %v430, %v431
          %v433 = vand.u32 2147483647, %v428
          %v434 = vsub.f32 0.0, %v433
          %v435 = vmul.f32 %v434, 1.442695
          %v436 = vpow.pop %v435
          %v437 = vadd.f32 %v436, 1.0
          %v438 = vlog2.pop %v437
          %v439 = vmul.f32 %v438, 0.6931472
          %v440 = vmul.f32 -0.5, %v436
          %v441 = vadd.f32 %v440, 1.0
          %v442 = vmul.f32 %v441, %v436
          %v443 = vand.u32 2147483647, %v436
          %vm444 = vcmp.lt.f32.partialorder %v443, 0.0004427343
          %v445 = vsel %vm444, %v442, %v439
          %v446 = vadd.f32 %v432, %v445
          %v447 = vld [vmem:[#allocation2] sm:$0x3]
          %v448 = vadd.f32 %v447, %v446
          %vm449 = vcmask 254976
          %450 = vst.msk [vmem:[#allocation2] sm:$0x3] %vm449, %v448
          %v451 = vld [vmem:[%s345] sm:$0x3]
          %v452 = vld [vmem:[%s410] sm:$0x3]
          %v453 = vsub.f32 %v451, %v452
          %v454 = vmul.f32 %v453, %v453
          %v455 = vld [vmem:[#allocation3] sm:$0x3]
          %v456 = vadd.f32 %v455, %v454
          %457 = vst.msk [vmem:[#allocation3] sm:$0x3] %vm449, %v456
        $region56: #{tpu_custom_call.1} parent=35 // pred_fallthru
          _
        // Predicated region
        $region57: #{tpu_custom_call.1} parent=35 // pred_check
          %p458 = pneg %p414
        $region58: #{tpu_custom_call.1} parent=35 // pred_check_branch
          %460 = sbr.rel (%p458) target = $region60
        $region59: #{tpu_custom_call.1} parent=35 // pred_region
          %v461 = vld [vmem:[#allocation2] sm:$0x3]
          %vm462 = vcmask 254976
          %v463 = vsel %vm462, %v461, 0.0
          %464 = vadd.xlane.f32.xlu0 %v463
          %v465 = vpop.xlane.xlu0 %464
          %v466 = vrot.slane %v465, 4
          %v467 = vadd.f32 %v465, %v466
          %v468 = vrot.slane %v467, 2
          %v469 = vadd.f32 %v467, %v468
          %v470 = vrot.slane %v469, 1
          %v471 = vadd.f32 %v469, %v470
          %s472 = vtos %v471
          %v473 = vstv %s472
          %474 = vst [vmem:[%s387] sm:$0xff] %v473
          %v475 = vld [vmem:[#allocation3] sm:$0x3]
          %v476 = vsel %vm462, %v475, 0.0
          %477 = vadd.xlane.f32.xlu0 %v476
          %v478 = vpop.xlane.xlu0 %477
          %v479 = vrot.slane %v478, 4
          %v480 = vadd.f32 %v478, %v479
          %v481 = vrot.slane %v480, 2
          %v482 = vadd.f32 %v480, %v481
          %v483 = vrot.slane %v482, 1
          %v484 = vadd.f32 %v482, %v483
          %s485 = vtos %v484
          %v486 = vstv %s485
          %487 = vst [vmem:[%s394] sm:$0xff] %v486
        $region60: #{tpu_custom_call.1} parent=35 // pred_fallthru
          _
        %s488 = sand.u32 %s177, 1
        %s489 = scalar_lea.sflag [#allocation6], %s488
        %s490 = sand.u32 %s177, 1
        %s491 = smul.addr %s490, 8
        %s492 = scalar_lea.vmem [#allocation10], %s491
        %s493 = sand.u32 %s203, 1
        %s494 = scalar_lea.sflag [#allocation12], %s493
        %s495 = sand.u32 %s203, 1
        %s496 = smul.addr %s495, 8
        %s497 = scalar_lea.vmem [#allocation11], %s496
        // Predicated region
        $region61: #{tpu_custom_call.1} parent=35 // pred_check
          %p498 = pneg %p187
        $region62: #{tpu_custom_call.1} parent=35 // pred_check_branch
          %500 = sbr.rel (%p498) target = $region64
        $region63: #{tpu_custom_call.1} parent=35 // pred_region
          %502 = vsyncadd %s489, 0
          %s503 = smul.addr %s33, 8
          %s504 = scalar_lea.hbm %s4, %s503
          %s506 = sshll.u32 %s492, 4
          %s507 = int_to_ptr.vmem [resolvable:$true] %s506
          %s508 = sshll.u32 %s504, 4
          %s509 = int_to_ptr.hbm [resolvable:$true] %s508
          %511 = dma.vmem_to_hbm [thread:$0]  %s507, 128, %s509, %s489
        $region64: #{tpu_custom_call.1} parent=35 // pred_fallthru
          _
        // Predicated region
        $region65: #{tpu_custom_call.1} parent=35 // pred_check
          %p512 = pneg %p213
        $region66: #{tpu_custom_call.1} parent=35 // pred_check_branch
          %514 = sbr.rel (%p512) target = $region68
        $region67: #{tpu_custom_call.1} parent=35 // pred_region
          %516 = vsyncadd %s494, 0
          %s517 = smul.addr %s33, 8
          %s518 = scalar_lea.hbm %s5, %s517
          %s520 = sshll.u32 %s497, 4
          %s521 = int_to_ptr.vmem [resolvable:$true] %s520
          %s522 = sshll.u32 %s518, 4
          %s523 = int_to_ptr.hbm [resolvable:$true] %s522
          %525 = dma.vmem_to_hbm [thread:$0]  %s521, 128, %s523, %s494
        $region68: #{tpu_custom_call.1} parent=35 // pred_fallthru
          _
      $region36: #{tpu_custom_call.1} parent=5 // pred_fallthru
        _
      %p526 = scmp.le.s32.totalorder 2, %s24
      // Predicated region
      $region69: #{tpu_custom_call.1} parent=5 // pred_check
        %p527 = pneg %p526
      $region70: #{tpu_custom_call.1} parent=5 // pred_check_branch
        %529 = sbr.rel (%p527) target = $region72
      $region71: #{tpu_custom_call.1} parent=5 // pred_region
        %s530 = ssub.s32 %s24, 2
        // Predicated region
        $region73: #{tpu_custom_call.1} parent=71 // pred_check
          %p531 = pneg %p193
        $region74: #{tpu_custom_call.1} parent=71 // pred_check_branch
          %533 = sbr.rel (%p531) target = $region76
        $region75: #{tpu_custom_call.1} parent=71 // pred_region
          %s534 = sand.u32 %s178, 1
          %s535 = scalar_lea.sflag [#allocation6], %s534
          %s536 = sand.u32 %s178, 1
          %s537 = smul.addr %s536, 8
          %s538 = scalar_lea.vmem [#allocation10], %s537
          %540 = dma.done %s535, 128
        $region76: #{tpu_custom_call.1} parent=71 // pred_fallthru
          _
        // Predicated region
        $region77: #{tpu_custom_call.1} parent=71 // pred_check
          %p541 = pneg %p219
        $region78: #{tpu_custom_call.1} parent=71 // pred_check_branch
          %543 = sbr.rel (%p541) target = $region80
        $region79: #{tpu_custom_call.1} parent=71 // pred_region
          %s544 = sand.u32 %s204, 1
          %s545 = scalar_lea.sflag [#allocation12], %s544
          %s546 = sand.u32 %s204, 1
          %s547 = smul.addr %s546, 8
          %s548 = scalar_lea.vmem [#allocation11], %s547
          %550 = dma.done %s545, 128
        $region80: #{tpu_custom_call.1} parent=71 // pred_fallthru
          _
      $region72: #{tpu_custom_call.1} parent=5 // pred_fallthru
        _
    $region6: #{tpu_custom_call.1} parent=1 // loop_footer
      %s28 = sadd.s32 1, %s24
    $region7: #{tpu_custom_call.1} parent=1 // loop_footer_branch
      %23 = sbr.rel target = $region3
    $region8: #{tpu_custom_call.1} parent=1 // loop_exit
      _
    %551 = vsyncpa [#allocation5], 1
    %s552 = scalar_lea.sflag [#allocation5], 1
    %553 = vsyncpa %s552, 1
    %554 = vsyncpa [#allocation8], 1
    %s555 = scalar_lea.sflag [#allocation8], 1
    %556 = vsyncpa %s555, 1
    %557 = vsyncpa [#allocation6], 1
    %s558 = scalar_lea.sflag [#allocation6], 1
    %559 = vsyncpa %s558, 1
    %560 = vsyncpa [#allocation12], 1
    %s561 = scalar_lea.sflag [#allocation12], 1
    %562 = vsyncpa %s561, 1

</llo_original>
